<compile_context>
chip_gen: v7x
topology: tpu7x:2x2x1
jax: 0.10.0
libtpu: 0.0.40
codegen_flags: <defaults>
</compile_context>

<pallas_src>
import functools

import jax
import jax.numpy as jnp
from jax.experimental import pallas as pl
from jax.experimental.pallas import tpu as pltpu

_EPS = 1e-6
_LANE = 128


def _smape_elementwise_kernel(x_ref, t_ref, o_ref):
    """reduction='none' path: per-element loss, exact divide, output dtype."""
    x = x_ref[...].astype(jnp.float32)
    t = t_ref[...].astype(jnp.float32)
    num = jnp.abs(t - x)
    den = (jnp.abs(t) + jnp.abs(x)) * 0.5 + _EPS
    o_ref[...] = (num / den).astype(o_ref.dtype)


def _make_reduce_kernel(tile_rows, total_rows, blocks_per_partial, num_blocks,
                        needs_mask, acc_rows):
    """Sum-reduction kernel for grid (num_partials, blocks_per_partial)."""
    fold_groups = tile_rows // acc_rows

    def fold(r):
        # Fold the (tr,128) block into a single-vreg-ish (acc_rows,128) tile
        # with pure cross-vreg VALU adds (reshape splits sublanes at 8-row
        # granularity, so no cross-tile relayout).
        if fold_groups == 1:
            return r
        return r.reshape(fold_groups, acc_rows, _LANE).sum(axis=0)

    def kernel(x_ref, t_ref, o_ref, acc_ref):
        b = pl.program_id(1)

        @pl.when(b == 0)
        def _():
            acc_ref[...] = jnp.zeros_like(acc_ref)

        x = x_ref[...].astype(jnp.float32)
        t = t_ref[...].astype(jnp.float32)
        num = jnp.abs(t - x)
        den = (jnp.abs(t) + jnp.abs(x)) * 0.5 + _EPS
        # EUP reciprocal keeps the kernel memory-bound on v7x; error averages
        # out over the reduction.
        ratio = num * pl.reciprocal(den, approx=True)

        if needs_mask:
            blk = pl.program_id(0) * blocks_per_partial + b

            # Steady state: no masking work at all.
            @pl.when(blk < num_blocks - 1)
            def _():
                acc_ref[...] += fold(ratio)

            # Last real block (tail rows) and phantom block (everything):
            # rows >= total_rows covers both, and garbage/NaN in OOB lanes
            # cannot propagate through jnp.where.
            @pl.when(blk >= num_blocks - 1)
            def _():
                rows = blk * tile_rows + jax.lax.broadcasted_iota(
                    jnp.int32, ratio.shape, 0)
                acc_ref[...] += fold(jnp.where(rows < total_rows, ratio, 0.0))
        else:
            acc_ref[...] += fold(ratio)

        @pl.when(b == pl.num_programs(1) - 1)
        def _():
            # Single tiny sublane reduce at the end; lane-dense (1,1,128) store.
            o_ref[...] = jnp.sum(acc_ref[...], axis=0, keepdims=True)[None]

    return kernel


def _smape_xla(x, t):
    """Plain-XLA per-element sMAPE (ragged-tail / tiny-input fallback)."""
    x = x.astype(jnp.float32)
    t = t.astype(jnp.float32)
    num = jnp.abs(t - x)
    den = (jnp.abs(t) + jnp.abs(x)) * 0.5 + _EPS
    return num / den


@functools.partial(jax.jit, static_argnames=("reduction", "tile_rows"))
def smape_loss(inputs, targets, reduction="mean", tile_rows=4096):
    """Pallas implementation of sMAPELoss.forward."""
    if reduction not in ("none", "mean", "sum"):
        raise ValueError(f"Invalid reduction mode: {reduction}")
    assert inputs.shape == targets.shape

    orig_shape = inputs.shape
    n = inputs.size
    out_dtype = jnp.result_type(inputs.dtype, targets.dtype)
    if not jnp.issubdtype(out_dtype, jnp.floating):
        out_dtype = jnp.float32

    flat_x = inputs.reshape(-1)
    flat_t = targets.reshape(-1)
    n_aligned = (n // _LANE) * _LANE
    m = n_aligned // _LANE  # full 128-lane rows

    # Tiny inputs (< one lane row): not worth a kernel launch.
    if m == 0:
        loss = _smape_xla(flat_x, flat_t)
        if reduction == "mean":
            return jnp.mean(loss).astype(out_dtype)
        if reduction == "sum":
            return jnp.sum(loss).astype(out_dtype)
        return loss.astype(out_dtype).reshape(orig_shape)

    # 128-aligned prefix goes through the kernel (free reshape of the prefix);
    # the <=127-element ragged tail is handled in XLA below.
    x = flat_x[:n_aligned].reshape(m, _LANE)
    t = flat_t[:n_aligned].reshape(m, _LANE)
    has_tail = n_aligned != n

    # Block rows: as large as requested, capped at the array; if smaller than
    # the array it must be a multiple of 8 (sublane tiling).
    tr = min(int(tile_rows), m)
    if tr < m:
        tr = max(8, (tr // 8) * 8)
    num_blocks = pl.cdiv(m, tr)

    item = max(jnp.dtype(inputs.dtype).itemsize, jnp.dtype(targets.dtype).itemsize)
    blk_bytes = tr * _LANE * item

    def _compiler_params(dim_sem, n_block_arrays):
        kw = dict(dimension_semantics=dim_sem)
        # Double-buffered block arrays + slack; only raise the scoped-VMEM
        # limit (important on v5e's 16 MiB default) if tile_rows was raised.
        vmem_est = 2 * n_block_arrays * blk_bytes + (2 << 20)
        if vmem_est > (14 << 20):
            kw["vmem_limit_bytes"] = int(min(vmem_est + (4 << 20), 48 << 20))
        return pltpu.CompilerParams(**kw)

    if reduction == "none":
        out = pl.pallas_call(
            _smape_elementwise_kernel,
            out_shape=jax.ShapeDtypeStruct((m, _LANE), out_dtype),
            grid=(num_blocks,),
            in_specs=[
                pl.BlockSpec((tr, _LANE), lambda i: (i, 0)),
                pl.BlockSpec((tr, _LANE), lambda i: (i, 0)),
            ],
            out_specs=pl.BlockSpec((tr, _LANE), lambda i: (i, 0)),
            compiler_params=_compiler_params(("parallel",), 3),
        )(x, t)
        if has_tail:
            tail = _smape_xla(flat_x[n_aligned:], flat_t[n_aligned:]).astype(out_dtype)
            return jnp.concatenate([out.reshape(-1), tail]).reshape(orig_shape)
        return out.reshape(orig_shape)

    # --- 'mean' / 'sum': partial-sum reduction ---
    # Always 2 partials when there are >=2 blocks so both v7x TensorCores
    # stream HBM; odd block counts get one clamped+masked phantom step.
    num_partials = 2 if num_blocks >= 2 else 1
    blocks_per_partial = pl.cdiv(num_blocks, num_partials)
    has_phantom = num_partials * blocks_per_partial != num_blocks
    needs_mask = has_phantom or (m % tr != 0)
    acc_rows = 8 if tr % 8 == 0 else tr  # single-vreg accumulator when possible

    if has_phantom:
        def in_map(p, b):
            # Clamp so the phantom block re-reads the last real block
            # (no OOB DMA); its contribution is zeroed by the row mask.
            return (jnp.minimum(p * blocks_per_partial + b, num_blocks - 1), 0)
    else:
        def in_map(p, b):
            return (p * blocks_per_partial + b, 0)

    kernel = _make_reduce_kernel(tr, m, blocks_per_partial, num_blocks,
                                 needs_mask, acc_rows)
    partials = pl.pallas_call(
        kernel,
        out_shape=jax.ShapeDtypeStruct((num_partials, 1, _LANE), jnp.float32),
        grid=(num_partials, blocks_per_partial),
        in_specs=[
            pl.BlockSpec((tr, _LANE), in_map),
            pl.BlockSpec((tr, _LANE), in_map),
        ],
        out_specs=pl.BlockSpec((1, 1, _LANE), lambda p, b: (p, 0, 0)),
        scratch_shapes=[pltpu.VMEM((acc_rows, _LANE), jnp.float32)],
        compiler_params=_compiler_params(("parallel", "arbitrary"), 2),
    )(x, t)

    total = jnp.sum(partials)  # tiny final combine (<= 2*128 f32) in XLA
    if has_tail:
        total = total + jnp.sum(_smape_xla(flat_x[n_aligned:], flat_t[n_aligned:]))
    if reduction == "mean":
        return (total / jnp.float32(n)).astype(out_dtype)
    return total.astype(out_dtype)  # 'sum'
    # Note: casting the f32-accumulated scalar to a low-precision out_dtype
    # (bf16 inputs) intentionally matches torch's output dtype behavior.


def _smape_ref(inputs, targets, reduction="mean"):
    num = jnp.abs(targets - inputs)
    den = (jnp.abs(targets) + jnp.abs(inputs)) / 2 + _EPS
    loss = num / den
    if reduction == "mean":
        return loss.mean()
    if reduction == "sum":
        return loss.sum()
    return loss


if __name__ == "__main__":
    key = jax.random.PRNGKey(0)
    k1, k2, k3, k4, k5, k6, k7, k8, k9, k10 = jax.random.split(key, 10)

    # Primary: typical NCHW input to the loss (single-block path).
    shape = (2, 4, 16, 16)
    inputs = jax.random.normal(k1, shape, dtype=jnp.float32)
    targets = jax.random.normal(k2, shape, dtype=jnp.float32)

    out_mean = jax.block_until_ready(smape_loss(inputs, targets, "mean"))
    out_sum = jax.block_until_ready(smape_loss(inputs, targets, "sum"))
    out_none = jax.block_until_ready(smape_loss(inputs, targets, "none"))

    # mean/sum use the EUP approx-reciprocal -> slightly looser tolerance.
    assert jnp.allclose(out_mean, _smape_ref(inputs, targets, "mean"),
                        rtol=1e-3, atol=1e-3)
    assert jnp.allclose(out_sum, _smape_ref(inputs, targets, "sum"),
                        rtol=1e-3, atol=1e-2)
    assert out_none.shape == shape
    assert jnp.allclose(out_none, _smape_ref(inputs, targets, "none"),
                        rtol=1e-5, atol=1e-5)

    # Ragged size (numel % 128 != 0): aligned-prefix kernel + XLA tail combine.
    rshape = (7, 13, 11)
    ri = jax.random.normal(k3, rshape, dtype=jnp.float32)
    rt = jax.random.normal(k4, rshape, dtype=jnp.float32)
    assert jnp.allclose(jax.block_until_ready(smape_loss(ri, rt, "mean")),
                        _smape_ref(ri, rt, "mean"), rtol=1e-3, atol=1e-3)
    assert jnp.allclose(jax.block_until_ready(smape_loss(ri, rt, "none")),
                        _smape_ref(ri, rt, "none"), rtol=1e-5, atol=1e-5)

    # Tiny input (< 128 elements): pure-XLA fallback path.
    tshape = (3, 5)
    ti = jax.random.normal(k5, tshape, dtype=jnp.float32)
    tt = jax.random.normal(k6, tshape, dtype=jnp.float32)
    assert jnp.allclose(jax.block_until_ready(smape_loss(ti, tt, "mean")),
                        _smape_ref(ti, tt, "mean"), rtol=1e-5, atol=1e-5)
    assert jnp.allclose(jax.block_until_ready(smape_loss(ti, tt, "none")),
                        _smape_ref(ti, tt, "none"), rtol=1e-5, atol=1e-5)

    # Odd block count with small tile_rows: exercises the always-2-partial
    # cdiv split (phantom block, clamped index_map) and gated tail-row mask.
    oshape = (4, 8, 16, 80)  # 40960 elems -> m=320 rows, tr=128 -> 3 blocks
    oi = jax.random.normal(k7, oshape, dtype=jnp.float32)
    ot = jax.random.normal(k8, oshape, dtype=jnp.float32)
    assert jnp.allclose(
        jax.block_until_ready(smape_loss(oi, ot, "mean", tile_rows=128)),
        _smape_ref(oi, ot, "mean"), rtol=1e-3, atol=1e-3)
    assert jnp.allclose(
        jax.block_until_ready(smape_loss(oi, ot, "sum", tile_rows=128)),
        _smape_ref(oi, ot, "sum"), rtol=1e-3, atol=1e-1)

    # Even multi-block at the default tile size (clean 2-partial split).
    eshape = (2, 8, 128, 512)  # 1,048,576 elems -> m=8192 rows -> 2 blocks
    ei = jax.random.normal(k9, eshape, dtype=jnp.float32)
    et = jax.random.normal(k10, eshape, dtype=jnp.float32)
    assert jnp.allclose(jax.block_until_ready(smape_loss(ei, et, "mean")),
                        _smape_ref(ei, et, "mean"), rtol=1e-3, atol=1e-3)

    print("KERNEL_OK")
</pallas_src>

<mosaic_0001>
module attributes {stable_mosaic.version = 11 : i64} {
  func.func @kernel(%arg0: i32, %arg1: i32, %arg2: memref<16x128xf32, #tpu.memory_space<vmem>>, %arg3: memref<16x128xf32, #tpu.memory_space<vmem>>, %arg4: memref<1x1x128xf32, #tpu.memory_space<vmem>>, %arg5: memref<8x128xf32, #tpu.memory_space<vmem>>) attributes {dimension_semantics = [#tpu.dimension_semantics<parallel>, #tpu.dimension_semantics<arbitrary>], iteration_bounds = array<i64: 1, 1>, scalar_prefetch = 0 : i64, scratch_operands = 1 : i64, tpu.core_type = #tpu.core_type<tc>, window_params = [{transform_indices = @transform_0, window_bounds = array<i64: 16, 128>}, {transform_indices = @transform_1, window_bounds = array<i64: 16, 128>}, {transform_indices = @transform_2, window_bounds = array<i64: 1, 1, 128>}]} {
    %c0_i32 = arith.constant 0 : i32
    %0 = arith.cmpi eq, %arg1, %c0_i32 : i32
    %1 = arith.extui %0 : i1 to i32
    %c0_i32_0 = arith.constant 0 : i32
    %2 = arith.cmpi ne, %1, %c0_i32_0 : i32
    scf.if %2 {
      %cst_12 = arith.constant 0.000000e+00 : f32
      %24 = vector.broadcast %cst_12 : f32 to vector<8x128xf32>
      %c0_13 = arith.constant 0 : index
      %c0_14 = arith.constant 0 : index
      %25 = vector.load %arg5[%c0_13, %c0_14] : memref<8x128xf32, #tpu.memory_space<vmem>>, vector<8x128xf32>
      tpu.vector_store %arg5[%c0_13, %c0_14], %24 {strides = array<i32>} : memref<8x128xf32, #tpu.memory_space<vmem>>, vector<8x128xf32>,
    } else {
    }
    %c0 = arith.constant 0 : index
    %c0_1 = arith.constant 0 : index
    %3 = vector.load %arg2[%c0, %c0_1] : memref<16x128xf32, #tpu.memory_space<vmem>>, vector<16x128xf32>
    %c0_2 = arith.constant 0 : index
    %c0_3 = arith.constant 0 : index
    %4 = vector.load %arg3[%c0_2, %c0_3] : memref<16x128xf32, #tpu.memory_space<vmem>>, vector<16x128xf32>
    %5 = arith.subf %4, %3 : vector<16x128xf32>
    %6 = math.absf %5 : vector<16x128xf32>
    %7 = math.absf %4 : vector<16x128xf32>
    %8 = math.absf %3 : vector<16x128xf32>
    %9 = arith.addf %7, %8 : vector<16x128xf32>
    %cst = arith.constant 5.000000e-01 : f32
    %10 = vector.broadcast %cst : f32 to vector<16x128xf32>
    %11 = arith.mulf %9, %10 : vector<16x128xf32>
    %cst_4 = arith.constant 9.99999997E-7 : f32
    %12 = vector.broadcast %cst_4 : f32 to vector<16x128xf32>
    %13 = arith.addf %11, %12 : vector<16x128xf32>
    %14 = tpu.reciprocal %13 {approx = true} : vector<16x128xf32> -> vector<16x128xf32>
    %15 = arith.mulf %6, %14 : vector<16x128xf32>
    %c0_5 = arith.constant 0 : index
    %c0_6 = arith.constant 0 : index
    %16 = vector.load %arg5[%c0_5, %c0_6] : memref<8x128xf32, #tpu.memory_space<vmem>>, vector<8x128xf32>
    %17 = vector.shape_cast %15 : vector<16x128xf32> to vector<2x8x128xf32>
    %cst_7 = arith.constant dense<0.000000e+00> : vector<8x128xf32>
    %18 = vector.multi_reduction <add>, %17, %cst_7 [0] : vector<2x8x128xf32> to vector<8x128xf32>
    %19 = arith.addf %16, %18 : vector<8x128xf32>
    %c0_8 = arith.constant 0 : index
    %c0_9 = arith.constant 0 : index
    %20 = vector.load %arg5[%c0_8, %c0_9] : memref<8x128xf32, #tpu.memory_space<vmem>>, vector<8x128xf32>
    tpu.vector_store %arg5[%c0_8, %c0_9], %19 {strides = array<i32>} : memref<8x128xf32, #tpu.memory_space<vmem>>, vector<8x128xf32>,
    %c0_i32_10 = arith.constant 0 : i32
    %21 = arith.cmpi eq, %arg1, %c0_i32_10 : i32
    %22 = arith.extui %21 : i1 to i32
    %c0_i32_11 = arith.constant 0 : i32
    %23 = arith.cmpi ne, %22, %c0_i32_11 : i32
    scf.if %23 {
      %c0_12 = arith.constant 0 : index
      %c0_13 = arith.constant 0 : index
      %24 = vector.load %arg5[%c0_12, %c0_13] : memref<8x128xf32, #tpu.memory_space<vmem>>, vector<8x128xf32>
      %cst_14 = arith.constant dense<0.000000e+00> : vector<128xf32>
      %25 = vector.multi_reduction <add>, %24, %cst_14 [0] : vector<8x128xf32> to vector<128xf32>
      %26 = vector.shape_cast %25 : vector<128xf32> to vector<1x128xf32>
      %27 = vector.shape_cast %26 : vector<1x128xf32> to vector<1x1x128xf32>
      %c0_15 = arith.constant 0 : index
      %c0_16 = arith.constant 0 : index
      %c0_17 = arith.constant 0 : index
      %28 = vector.load %arg4[%c0_15, %c0_16, %c0_17] : memref<1x1x128xf32, #tpu.memory_space<vmem>>, vector<1x1x128xf32>
      tpu.vector_store %arg4[%c0_15, %c0_16, %c0_17], %27 {strides = array<i32>} : memref<1x1x128xf32, #tpu.memory_space<vmem>>, vector<1x1x128xf32>,
    } else {
    }
    return
  }
  func.func @transform_0(%arg0: i32, %arg1: i32) -> (i32, i32) {
    %c1_i32 = arith.constant 1 : i32
    %0 = arith.muli %arg0, %c1_i32 : i32
    %1 = arith.addi %0, %arg1 : i32
    %c0_i32 = arith.constant 0 : i32
    %c0_i32_0 = arith.constant 0 : i32
    return %1, %c0_i32 : i32, i32
  }
  func.func @transform_1(%arg0: i32, %arg1: i32) -> (i32, i32) {
    %c1_i32 = arith.constant 1 : i32
    %0 = arith.muli %arg0, %c1_i32 : i32
    %1 = arith.addi %0, %arg1 : i32
    %c0_i32 = arith.constant 0 : i32
    %c0_i32_0 = arith.constant 0 : i32
    return %1, %c0_i32 : i32, i32
  }
  func.func @transform_2(%arg0: i32, %arg1: i32) -> (i32, i32, i32) {
    %c0_i32 = arith.constant 0 : i32
    %c0_i32_0 = arith.constant 0 : i32
    %c0_i32_1 = arith.constant 0 : i32
    return %arg0, %c0_i32, %c0_i32_0 : i32, i32, i32
  }
}

</mosaic_0001>

<llo_original>
// kernel: smape_loss.1
$region0: #{smape_loss.1}
  #allocation0 [shape = 'u32[]', space=smem, size = 0x4, offset = 0x4, fixed_abs, tag = 'smem constant byte address 0x4 - core index']
  #allocation1 [shape = 'u32[144,128]{1,0:T(1,128)}', space=vmem, size = 0x12000, scoped, tag = 'internal scratch']
  #allocation2 [shape = 'f32[8,128]{1,0:T(8,128)}', space=vmem, size = 0x1000, scoped, tag = 'scratch operand']
  %s0 = inlined_call_operand.vmem [shape: f32[16,128], index: 0, kind: input, shape index: {}]
  %s1 = inlined_call_operand.vmem [shape: f32[16,128], index: 1, kind: input, shape index: {}]
  %s2 = inlined_call_operand.vmem [shape: f32[1,1,128], index: 2, kind: output, shape index: {}]
  %s3 = sld [smem:[#allocation0]]
  $region26: #{smape_loss.1} parent=0
    _
  %s5 = ssub.s32 1, %s3
  %s6 = scalar_select 0, %s5, %s3
  // Predicated region
  $region2: #{smape_loss.1} parent=0 // pred_check
    _
  $region3: #{smape_loss.1} parent=0 // pred_check_branch
    %8 = sbr.rel (0) target = $region5
  $region4: #{smape_loss.1} parent=0 // pred_region
    %s9 = sadd.s32 0, 0
    %s10 = smul.u32 2, %s9
    %p11 = scmp.lt.s32.totalorder %s10, 1
    %s12 = scalar_select %p11, %s10, 1
    %s13 = smul.addr %s12, 8
    %s14 = scalar_lea.vmem %s0, %s13
    %s15 = sadd.s32 0, 0
    %s16 = smul.u32 2, %s15
  $region5: #{smape_loss.1} parent=0 // pred_fallthru
    _
  // Predicated region
  $region6: #{smape_loss.1} parent=0 // pred_check
    _
  $region7: #{smape_loss.1} parent=0 // pred_check_branch
    %18 = sbr.rel (0) target = $region9
  $region8: #{smape_loss.1} parent=0 // pred_region
    %s19 = sadd.s32 0, 0
    %s20 = smul.u32 2, %s19
    %p21 = scmp.lt.s32.totalorder %s20, 1
    %s22 = scalar_select %p21, %s20, 1
    %s23 = smul.addr %s22, 8
    %s24 = scalar_lea.vmem %s1, %s23
    %s25 = sadd.s32 0, 0
    %s26 = smul.u32 2, %s25
  $region9: #{smape_loss.1} parent=0 // pred_fallthru
    _
  %s27 = sadd.s32 0, 0
  %s28 = smul.u32 2, %s27
  %p29 = scmp.lt.s32.totalorder %s28, 1
  %s30 = scalar_select %p29, %s28, 1
  %s31 = smul.addr %s30, 8
  %s32 = scalar_lea.vmem %s0, %s31
  %s33 = sadd.s32 0, 0
  %s34 = smul.u32 2, %s33
  %p35 = scmp.lt.s32.totalorder %s34, 1
  %s36 = scalar_select %p35, %s34, 1
  %s37 = smul.addr %s36, 8
  %s38 = scalar_lea.vmem %s1, %s37
  %s39 = sadd.s32 0, 0
  %s40 = smul.u32 2, %s39
  %p41 = scmp.lt.s32.totalorder %s40, 1
  %s42 = scalar_select %p41, %s40, 1
  %s43 = smul.addr %s42, 8
  %s44 = scalar_lea.vmem %s0, %s43
  %s45 = sadd.s32 0, 0
  %s46 = smul.u32 2, %s45
  %s47 = sadd.s32 0, 0
  %s48 = smul.u32 2, %s47
  %p49 = scmp.lt.s32.totalorder %s48, 1
  %s50 = scalar_select %p49, %s48, 1
  %s51 = smul.addr %s50, 8
  %s52 = scalar_lea.vmem %s1, %s51
  %s53 = sadd.s32 0, 0
  %s54 = smul.u32 2, %s53
  %p55 = scmp.eq.s32.totalorder 0, 0
  // Predicated region
  $region10: #{smape_loss.1} parent=0 // pred_check
    %p56 = pneg %p55
  $region11: #{smape_loss.1} parent=0 // pred_check_branch
    %58 = sbr.rel (%p56) target = $region13
  $region12: #{smape_loss.1} parent=0 // pred_region
    %59 = vst [vmem:[#allocation2] sm:$0xff] 0.0
  $region13: #{smape_loss.1} parent=0 // pred_fallthru
    _
  %v60 = vld [vmem:[%s44] sm:$0xff]
  %v61 = vld [vmem:[%s44 + $0x8] sm:$0xff]
  %v62 = vld [vmem:[%s52] sm:$0xff]
  %v63 = vld [vmem:[%s52 + $0x8] sm:$0xff]
  %v64 = vsub.f32 %v62, %v60
  %v65 = vsub.f32 %v63, %v61
  %v66 = vand.u32 2147483647, %v64
  %v67 = vand.u32 2147483647, %v65
  %v68 = vand.u32 2147483647, %v62
  %v69 = vand.u32 2147483647, %v63
  %v70 = vand.u32 2147483647, %v60
  %v71 = vand.u32 2147483647, %v61
  %v72 = vadd.f32 %v68, %v70
  %v73 = vadd.f32 %v69, %v71
  %v74 = vmul.f32 %v72, 0.5
  %v75 = vmul.f32 %v73, 0.5
  %v76 = vadd.f32 %v74, 1e-06
  %v77 = vadd.f32 %v75, 1e-06
  %v78 = vrcp.pop %v76
  %v79 = vrcp.pop %v77
  %v80 = vmul.f32 %v66, %v78
  %v81 = vmul.f32 %v67, %v79
  %v82 = vld [vmem:[#allocation2] sm:$0xff]
  %v83 = vadd.f32 %v80, %v81
  %v84 = vadd.f32 %v82, %v83
  %85 = vst [vmem:[#allocation2] sm:$0xff] %v84
  // Predicated region
  $region14: #{smape_loss.1} parent=0 // pred_check
    %p86 = pneg %p55
  $region15: #{smape_loss.1} parent=0 // pred_check_branch
    %88 = sbr.rel (%p86) target = $region17
  $region16: #{smape_loss.1} parent=0 // pred_region
    %v89 = vld [vmem:[#allocation2] sm:$0xff]
    %v90 = vrot.slane %v89, 4
    %v91 = vadd.f32 %v89, %v90
    %v92 = vrot.slane %v91, 2
    %v93 = vadd.f32 %v91, %v92
    %v94 = vrot.slane %v93, 1
    %v95 = vadd.f32 %v93, %v94
    %96 = vst [vmem:[%s2] sm:$0x1] %v95
  $region17: #{smape_loss.1} parent=0 // pred_fallthru
    _
  // Predicated region
  $region18: #{smape_loss.1} parent=0 // pred_check
    _
  $region19: #{smape_loss.1} parent=0 // pred_check_branch
    %98 = sbr.rel (0) target = $region21
  $region20: #{smape_loss.1} parent=0 // pred_region
    _
  $region21: #{smape_loss.1} parent=0 // pred_fallthru
    _
  // Predicated region
  $region22: #{smape_loss.1} parent=0 // pred_check
    _
  $region23: #{smape_loss.1} parent=0 // pred_check_branch
    %100 = sbr.rel (0) target = $region25
  $region24: #{smape_loss.1} parent=0 // pred_region
    _
  $region25: #{smape_loss.1} parent=0 // pred_fallthru
    _

</llo_original>
